<compile_context>
chip_gen: v5e
topology: v5e:2x2
jax: 0.10.0
libtpu: 0.0.40
codegen_flags: <defaults>
</compile_context>

<pallas_src>
import jax
import jax.numpy as jnp
from jax.experimental import pallas as pl
from jax.experimental.pallas import tpu as pltpu


# ---------------------------------------------------------------------------
# Fused kernel: one grid step == one batch element.
# ---------------------------------------------------------------------------
def _fused_attention_kernel(x_ref, w_qkv_ref, w_out_ref, b_out_ref, o_ref):
    """Per-grid-step refs:
      x_ref     : (n, dim)                   activations for this batch element
      w_qkv_ref : (3*heads, dim, dim_head)   head-major QKV weights, softmax
                                             scale pre-folded into the q heads
      w_out_ref : (heads, dim_head, dim)     head-major output projection
      b_out_ref : (1, dim)                   output bias
      o_ref     : (n, dim)                   output
    """
    n, dim = x_ref.shape
    heads = w_out_ref.shape[0]
    three_h = w_qkv_ref.shape[0]

    x = x_ref[...]                                          # input dtype

    # --- head-major QKV projection ------------------------------------------
    # One batched contraction over `dim` produces q/k/v directly in
    # (heads, n, dim_head) layout: no 'b n (h d) -> b h n d' relayout and no
    # dim_head-wide lane slices.  Broadcasting x over the 3*heads batch axis
    # costs the same MXU FLOPs as one dense (n, dim)@(dim, 3*inner) matmul.
    xb = jnp.broadcast_to(x[None, :, :], (three_h, n, dim))
    qkv = jnp.einsum("bnc,bcd->bnd", xb, w_qkv_ref[...],
                     preferred_element_type=jnp.float32)    # (3h, n, d)
    # Keep MXU operands in the input dtype (bf16 stays bf16); only the
    # accumulations / softmax statistics are f32.
    qkv = qkv.astype(x.dtype)

    q = qkv[:heads]                   # (h, n, d) -- scale already folded in W_q
    k = qkv[heads:2 * heads]          # (h, n, d)
    v = qkv[2 * heads:]               # (h, n, d)

    # --- head-batched scaled-dot-product attention ---------------------------
    dots = jnp.einsum("hqd,hkd->hqk", q, k,
                      preferred_element_type=jnp.float32)   # (h, n, n)
    # TODO(synk): mask path (masked_fill before softmax) not implemented.
    dots = dots - jnp.max(dots, axis=-1, keepdims=True)
    e = jnp.exp(dots)
    # Exact reciprocal keeps the kernel within ~1e-6 of the f32 reference;
    # flip to approx=True (EUP slot) for inference-only throughput.
    attn = e * pl.reciprocal(jnp.sum(e, axis=-1, keepdims=True), approx=False)

    ctx = jnp.einsum("hqk,hkd->hqd", attn.astype(v.dtype), v,
                     preferred_element_type=jnp.float32)    # (h, n, d)

    # --- output projection ----------------------------------------------------
    # 'b h n d -> b n (h d)' followed by @ W_out^T is fused into a head-batched
    # matmul plus a sum over the leading (vreg-tile) head axis: no context
    # scratch, no narrow masked stores.
    out_h = jnp.einsum("hnd,hdm->hnm", ctx.astype(x.dtype), w_out_ref[...],
                       preferred_element_type=jnp.float32)  # (h, n, dim)
    out = jnp.sum(out_h, axis=0) + b_out_ref[...].astype(jnp.float32)

    # Dropout == identity at inference.
    o_ref[...] = out.astype(o_ref.dtype)


# ---------------------------------------------------------------------------
# One-time parameter preparation (head-major weights, scale folded into W_q).
# ---------------------------------------------------------------------------
def prepare_params(params, heads, dim_head):
    dim = params["w_out"].shape[1]
    scale = dim_head ** (-0.5)
    w_qkv = params["w_qkv"]                                    # (dim, 3*inner)
    # (dim, 3*inner) -> (3*heads, dim, dim_head), head-major, matching
    # rearrange 'b n (h d) -> b h n d'.
    w_qkv_hm = (w_qkv.reshape(dim, 3, heads, dim_head)
                     .transpose(1, 2, 0, 3)
                     .reshape(3 * heads, dim, dim_head))
    # Fold the softmax scale into the q heads (one-time weight transform).
    w_qkv_hm = w_qkv_hm.at[:heads].multiply(scale)
    w_out_hm = params["w_out"].reshape(heads, dim_head, dim)   # (h, d, dim)
    b_out = params["b_out"].reshape(1, dim)
    return w_qkv_hm, w_out_hm, b_out


def attention_forward(x, prepared):
    w_qkv_hm, w_out_hm, b_out = prepared
    b, n, dim = x.shape
    three_h, _, dim_head = w_qkv_hm.shape
    heads = three_h // 3

    return pl.pallas_call(
        _fused_attention_kernel,
        out_shape=jax.ShapeDtypeStruct((b, n, dim), x.dtype),
        grid=(b,),
        in_specs=[
            pl.BlockSpec((None, n, dim), lambda i: (i, 0, 0)),            # x
            # Weights: constant index_map -> fetched once, resident across steps.
            pl.BlockSpec((three_h, dim, dim_head), lambda i: (0, 0, 0)),  # w_qkv (head-major)
            pl.BlockSpec((heads, dim_head, dim), lambda i: (0, 0, 0)),    # w_out (head-major)
            pl.BlockSpec((1, dim), lambda i: (0, 0)),                     # b_out
        ],
        out_specs=pl.BlockSpec((None, n, dim), lambda i: (i, 0, 0)),
        # grid=(b,) doubles as the v7x megacore axis: with b>=2 each
        # TensorCore takes a batch element (no-op on single-core v5e/v6e).
        compiler_params=pltpu.CompilerParams(
            dimension_semantics=("parallel",)),
    )(x, w_qkv_hm, w_out_hm, b_out)


# ---------------------------------------------------------------------------
# Pure-JAX reference (float32 matmul precision) for the correctness check.
# ---------------------------------------------------------------------------
def attention_reference(x, params, heads, dim_head):
    b, n, dim = x.shape
    inner = heads * dim_head
    scale = dim_head ** (-0.5)
    with jax.default_matmul_precision("float32"):
        qkv = x @ params["w_qkv"]
        q, k, v = jnp.split(qkv, 3, axis=-1)
        reshape = lambda t: t.reshape(b, n, heads, dim_head).transpose(0, 2, 1, 3)
        q, k, v = map(reshape, (q, k, v))
        dots = jnp.einsum("bhid,bhjd->bhij", q, k) * scale
        attn = jax.nn.softmax(dots, axis=-1)
        out = jnp.einsum("bhij,bhjd->bhid", attn, v)
        out = out.transpose(0, 2, 1, 3).reshape(b, n, inner)
        return out @ params["w_out"] + params["b_out"]


if __name__ == "__main__":
    # Small, module-consistent shapes.
    batch, seq, dim = 2, 8, 32
    heads, dim_head = 4, 8
    inner_dim = heads * dim_head
    dropout = 0.0  # identity at inference

    key = jax.random.PRNGKey(0)
    k_x, k_qkv, k_out, k_b = jax.random.split(key, 4)

    x = jax.random.normal(k_x, (batch, seq, dim), dtype=jnp.float32)

    # Deterministic synthetic parameters (stored pre-transposed: (in, out)).
    params = {
        "w_qkv": jax.random.normal(k_qkv, (dim, inner_dim * 3), jnp.float32)
                 * (dim ** -0.5),
        "w_out": jax.random.normal(k_out, (inner_dim, dim), jnp.float32)
                 * (inner_dim ** -0.5),
        "b_out": jax.random.normal(k_b, (dim,), jnp.float32) * 0.01,
    }

    # One-time weight transform (head-major layouts, softmax scale folded in).
    prepared = prepare_params(params, heads, dim_head)

    out = attention_forward(x, prepared)
    out = jax.block_until_ready(out)

    ref = attention_reference(x, params, heads, dim_head)
    assert out.shape == (batch, seq, dim)
    # Tightened from the previous 2e-2: the softmax now uses an exact
    # reciprocal; remaining budget covers transcendental-implementation and
    # accumulation-order differences vs. the float32-precision XLA reference.
    assert jnp.allclose(out, ref, atol=1e-3, rtol=1e-3), "mismatch vs reference"

    print("KERNEL_OK")
</pallas_src>

<mosaic_0001>
module attributes {stable_mosaic.version = 11 : i64} {
  func.func @_fused_attention_kernel(%arg0: i32, %arg1: memref<1x8x32xf32, #tpu.memory_space<vmem>>, %arg2: memref<12x32x8xf32, #tpu.memory_space<vmem>>, %arg3: memref<4x8x32xf32, #tpu.memory_space<vmem>>, %arg4: memref<1x32xf32, #tpu.memory_space<vmem>>, %arg5: memref<1x8x32xf32, #tpu.memory_space<vmem>>) attributes {dimension_semantics = [#tpu.dimension_semantics<parallel>], iteration_bounds = array<i64: 2>, scalar_prefetch = 0 : i64, scratch_operands = 0 : i64, tpu.core_type = #tpu.core_type<tc>, window_params = [{transform_indices = @transform_0, window_bounds = array<i64: 1, 8, 32>}, {pipeline_mode = #tpu.pipeline_mode<synchronous>, transform_indices = @transform_1, window_bounds = array<i64: 12, 32, 8>}, {pipeline_mode = #tpu.pipeline_mode<synchronous>, transform_indices = @transform_2, window_bounds = array<i64: 4, 8, 32>}, {pipeline_mode = #tpu.pipeline_mode<synchronous>, transform_indices = @transform_3, window_bounds = array<i64: 1, 32>}, {transform_indices = @transform_4, window_bounds = array<i64: 1, 8, 32>}]} {
    %c0 = arith.constant 0 : index
    %c0_0 = arith.constant 0 : index
    %c0_1 = arith.constant 0 : index
    %0 = vector.load %arg1[%c0, %c0_0, %c0_1] : memref<1x8x32xf32, #tpu.memory_space<vmem>>, vector<1x8x32xf32>
    %1 = vector.shape_cast %0 : vector<1x8x32xf32> to vector<8x32xf32>
    %2 = vector.shape_cast %1 : vector<8x32xf32> to vector<1x8x32xf32>
    %3 = vector.shape_cast %2 : vector<1x8x32xf32> to vector<1x8x32xf32>
    %4 = vector.broadcast %3 : vector<1x8x32xf32> to vector<12x8x32xf32>
    %c0_2 = arith.constant 0 : index
    %c0_3 = arith.constant 0 : index
    %c0_4 = arith.constant 0 : index
    %5 = vector.load %arg2[%c0_2, %c0_3, %c0_4] : memref<12x32x8xf32, #tpu.memory_space<vmem>>, vector<12x32x8xf32>
    "tpu.trace_start"() <{level = 10 : i32, message = "bnc,bcd->bnd"}> : () -> ()
    %cst = arith.constant dense<0.000000e+00> : vector<12x8x8xf32>
    %6 = tpu.matmul %4, %5, %cst {dimension_numbers = #tpu.dot_dimension_numbers<[2], [1], [1], [2], [0, 0, 0, 1, 1, 2], [0], [0]>} : vector<12x8x32xf32>, vector<12x32x8xf32>, vector<12x8x8xf32> -> vector<12x8x8xf32>
    "tpu.trace_stop"() : () -> ()
    %7 = vector.extract_strided_slice %6 {offsets = [0, 0, 0], sizes = [4, 8, 8], strides = [1, 1, 1]} : vector<12x8x8xf32> to vector<4x8x8xf32>
    %8 = vector.extract_strided_slice %6 {offsets = [4, 0, 0], sizes = [4, 8, 8], strides = [1, 1, 1]} : vector<12x8x8xf32> to vector<4x8x8xf32>
    %9 = vector.extract_strided_slice %6 {offsets = [8, 0, 0], sizes = [4, 8, 8], strides = [1, 1, 1]} : vector<12x8x8xf32> to vector<4x8x8xf32>
    "tpu.trace_start"() <{level = 10 : i32, message = "hqd,hkd->hqk"}> : () -> ()
    %cst_5 = arith.constant dense<0.000000e+00> : vector<4x8x8xf32>
    %10 = tpu.matmul %7, %8, %cst_5 {dimension_numbers = #tpu.dot_dimension_numbers<[2], [2], [1], [1], [0, 0, 0, 1, 1, 1], [0], [0]>} : vector<4x8x8xf32>, vector<4x8x8xf32>, vector<4x8x8xf32> -> vector<4x8x8xf32>
    "tpu.trace_stop"() : () -> ()
    %cst_6 = arith.constant dense<0xFF800000> : vector<4x8xf32>
    %11 = vector.multi_reduction <maximumf>, %10, %cst_6 [2] : vector<4x8x8xf32> to vector<4x8xf32>
    %12 = vector.shape_cast %11 : vector<4x8xf32> to vector<4x8x1xf32>
    %13 = vector.broadcast %12 : vector<4x8x1xf32> to vector<4x8x8xf32>
    %14 = arith.subf %10, %13 : vector<4x8x8xf32>
    %15 = math.exp %14 : vector<4x8x8xf32>
    %cst_7 = arith.constant dense<0.000000e+00> : vector<4x8xf32>
    %16 = vector.multi_reduction <add>, %15, %cst_7 [2] : vector<4x8x8xf32> to vector<4x8xf32>
    %17 = vector.shape_cast %16 : vector<4x8xf32> to vector<4x8x1xf32>
    %18 = tpu.reciprocal %17 : vector<4x8x1xf32> -> vector<4x8x1xf32>
    %19 = vector.broadcast %18 : vector<4x8x1xf32> to vector<4x8x8xf32>
    %20 = arith.mulf %15, %19 : vector<4x8x8xf32>
    "tpu.trace_start"() <{level = 10 : i32, message = "hqk,hkd->hqd"}> : () -> ()
    %cst_8 = arith.constant dense<0.000000e+00> : vector<4x8x8xf32>
    %21 = tpu.matmul %20, %9, %cst_8 {dimension_numbers = #tpu.dot_dimension_numbers<[2], [1], [1], [2], [0, 0, 0, 1, 1, 2], [0], [0]>} : vector<4x8x8xf32>, vector<4x8x8xf32>, vector<4x8x8xf32> -> vector<4x8x8xf32>
    "tpu.trace_stop"() : () -> ()
    %c0_9 = arith.constant 0 : index
    %c0_10 = arith.constant 0 : index
    %c0_11 = arith.constant 0 : index
    %22 = vector.load %arg3[%c0_9, %c0_10, %c0_11] : memref<4x8x32xf32, #tpu.memory_space<vmem>>, vector<4x8x32xf32>
    "tpu.trace_start"() <{level = 10 : i32, message = "hnd,hdm->hnm"}> : () -> ()
    %cst_12 = arith.constant dense<0.000000e+00> : vector<4x8x32xf32>
    %23 = tpu.matmul %21, %22, %cst_12 {dimension_numbers = #tpu.dot_dimension_numbers<[2], [1], [1], [2], [0, 0, 0, 1, 1, 2], [0], [0]>} : vector<4x8x8xf32>, vector<4x8x32xf32>, vector<4x8x32xf32> -> vector<4x8x32xf32>
    "tpu.trace_stop"() : () -> ()
    %cst_13 = arith.constant dense<0.000000e+00> : vector<8x32xf32>
    %24 = vector.multi_reduction <add>, %23, %cst_13 [0] : vector<4x8x32xf32> to vector<8x32xf32>
    %c0_14 = arith.constant 0 : index
    %c0_15 = arith.constant 0 : index
    %25 = vector.load %arg4[%c0_14, %c0_15] : memref<1x32xf32, #tpu.memory_space<vmem>>, vector<1x32xf32>
    %26 = vector.broadcast %25 : vector<1x32xf32> to vector<8x32xf32>
    %27 = arith.addf %24, %26 : vector<8x32xf32>
    %c0_16 = arith.constant 0 : index
    %c0_17 = arith.constant 0 : index
    %c0_18 = arith.constant 0 : index
    %28 = vector.load %arg5[%c0_16, %c0_17, %c0_18] : memref<1x8x32xf32, #tpu.memory_space<vmem>>, vector<1x8x32xf32>
    %29 = vector.shape_cast %28 : vector<1x8x32xf32> to vector<8x32xf32>
    %30 = vector.shape_cast %27 : vector<8x32xf32> to vector<1x8x32xf32>
    tpu.vector_store %arg5[%c0_16, %c0_17, %c0_18], %30 {strides = array<i32>} : memref<1x8x32xf32, #tpu.memory_space<vmem>>, vector<1x8x32xf32>,
    return
  }
  func.func @transform_0(%arg0: i32) -> (i32, i32, i32) {
    %c0_i32 = arith.constant 0 : i32
    %c0_i32_0 = arith.constant 0 : i32
    %c0_i32_1 = arith.constant 0 : i32
    return %arg0, %c0_i32, %c0_i32_0 : i32, i32, i32
  }
  func.func @transform_1(%arg0: i32) -> (i32, i32, i32) {
    %c0_i32 = arith.constant 0 : i32
    %c0_i32_0 = arith.constant 0 : i32
    %c0_i32_1 = arith.constant 0 : i32
    %c0_i32_2 = arith.constant 0 : i32
    return %c0_i32, %c0_i32_0, %c0_i32_1 : i32, i32, i32
  }
  func.func @transform_2(%arg0: i32) -> (i32, i32, i32) {
    %c0_i32 = arith.constant 0 : i32
    %c0_i32_0 = arith.constant 0 : i32
    %c0_i32_1 = arith.constant 0 : i32
    %c0_i32_2 = arith.constant 0 : i32
    return %c0_i32, %c0_i32_0, %c0_i32_1 : i32, i32, i32
  }
  func.func @transform_3(%arg0: i32) -> (i32, i32) {
    %c0_i32 = arith.constant 0 : i32
    %c0_i32_0 = arith.constant 0 : i32
    %c0_i32_1 = arith.constant 0 : i32
    return %c0_i32, %c0_i32_0 : i32, i32
  }
  func.func @transform_4(%arg0: i32) -> (i32, i32, i32) {
    %c0_i32 = arith.constant 0 : i32
    %c0_i32_0 = arith.constant 0 : i32
    %c0_i32_1 = arith.constant 0 : i32
    return %arg0, %c0_i32, %c0_i32_0 : i32, i32, i32
  }
}

</mosaic_0001>

<llo_original>
// kernel: tpu_custom_call.1
$region0: #{tpu_custom_call.1}
  #allocation0 [shape = 'u32[]', space=smem, size = 0x4, offset = 0x4, fixed_abs, tag = 'smem constant byte address 0x4 - core index']
  #allocation1 [shape = 'u32[72,128]{1,0:T(1,128)}', space=vmem, size = 0x9000, scoped, tag = 'internal scratch']
  %s0 = inlined_call_operand.vmem [shape: f32[2,8,32], index: 0, kind: input, shape index: {}]
  %s1 = inlined_call_operand.vmem [shape: f32[12,32,8], index: 1, kind: input, shape index: {}]
  %s2 = inlined_call_operand.vmem [shape: f32[4,8,32], index: 2, kind: input, shape index: {}]
  %s3 = inlined_call_operand.vmem [shape: f32[1,32], index: 3, kind: input, shape index: {}]
  %s4 = inlined_call_operand.hbm [shape: f32[2,8,32], index: 4, kind: output, shape index: {}]
  %s5 = sld [smem:[#allocation0]]
  $region49: #{tpu_custom_call.1} parent=0
    _
  %s7 = ssub.s32 1, %s5
  %s8 = scalar_select 0, %s7, %s5
  $region1: #{tpu_custom_call.1} parent=0
    #allocation2 [shape = 'u8[8192]{0}', space=vmem, size = 0x2000, scoped, tag = 'output window, operand 0']
    #allocation3 [shape = 's32[2]{0}', space=sflag, size = 0x8, scoped, tag = 'scoped memory for tpu_custom_call.1']
    %9 = vsyncpa [#allocation3], 0
    %s10 = scalar_lea.sflag [#allocation3], 1
    %11 = vsyncpa %s10, 0
    loop: start=0, step=1, limit=4
    $region2: #{tpu_custom_call.1} parent=1 // loop_pre_header
      _
    $region3: #{tpu_custom_call.1} parent=1 // loop_header
      %s13 = sphi 0, %s17
      %p14 = scmp.ge.s32.totalorder %s13, 4
      %s23 = sphi 0, %s25
      %s26 = sphi 0, %s23
      %s27 = sphi 0, %s26
      %s43 = sphi 0, %s27
      %s47 = sphi 0, %s47
      %s49 = sphi 0, %s47
      %s50 = sphi 0, %s49
      %s64 = sphi 0, %s50
      %s68 = sphi 0, %s68
      %s70 = sphi 0, %s68
      %s71 = sphi 0, %s70
      %s85 = sphi 0, %s71
      %s89 = sphi 0, %s89
      %s91 = sphi 0, %s89
      %s92 = sphi 0, %s91
      %s106 = sphi 0, %s92
      %s112 = sphi 0, %s114
      %s115 = sphi 0, %s112
      %s116 = sphi 0, %s115
      %s132 = sphi 0, %s116
    $region4: #{tpu_custom_call.1} parent=1 // loop_header_branch
      %16 = sbr.rel (%p14) target = $region8
    $region5: #{tpu_custom_call.1} parent=1 // loop_body
      %s18 = ssub.s32 %s13, 1
      %s19 = ssub.s32 %s13, 2
      %s20 = sadd.s32 %s13, 1
      %s21 = ssub.s32 %s13, %s20
      %p22 = scmp.eq.s32.totalorder %s21, 0
      %s24 = sadd.s32 %s23, 1
      %s25 = scalar_select %p22, %s23, %s24
      %p28 = pneg %p22
      %p29 = scmp.eq.s32.totalorder %s13, 1
      %p30 = por %p28, %p29
      %p31 = scmp.ne.s32.totalorder %s23, %s26
      %p32 = scmp.eq.s32.totalorder %s13, 0
      %p33 = por %p31, %p32
      %p34 = scmp.ne.s32.totalorder %s23, %s26
      %p35 = scmp.eq.s32.totalorder %s18, 1
      %p36 = por %p34, %p35
      %p37 = scmp.ne.s32.totalorder %s26, %s27
      %p38 = scmp.eq.s32.totalorder %s18, 0
      %p39 = por %p37, %p38
      %p40 = scmp.ne.s32.totalorder %s26, %s27
      %p41 = scmp.eq.s32.totalorder %s19, 1
      %p42 = por %p40, %p41
      %p44 = scmp.ne.s32.totalorder %s27, %s43
      %p45 = scmp.eq.s32.totalorder %s19, 0
      %p46 = por %p44, %p45
      %s48 = sadd.s32 %s47, 1
      %p51 = scmp.eq.s32.totalorder %s13, 1
      %p52 = scmp.ne.s32.totalorder %s47, %s49
      %p53 = scmp.eq.s32.totalorder %s13, 0
      %p54 = por %p52, %p53
      %p55 = scmp.ne.s32.totalorder %s47, %s49
      %p56 = scmp.eq.s32.totalorder %s18, 1
      %p57 = por %p55, %p56
      %p58 = scmp.ne.s32.totalorder %s49, %s50
      %p59 = scmp.eq.s32.totalorder %s18, 0
      %p60 = por %p58, %p59
      %p61 = scmp.ne.s32.totalorder %s49, %s50
      %p62 = scmp.eq.s32.totalorder %s19, 1
      %p63 = por %p61, %p62
      %p65 = scmp.ne.s32.totalorder %s50, %s64
      %p66 = scmp.eq.s32.totalorder %s19, 0
      %p67 = por %p65, %p66
      %s69 = sadd.s32 %s68, 1
      %p72 = scmp.eq.s32.totalorder %s13, 1
      %p73 = scmp.ne.s32.totalorder %s68, %s70
      %p74 = scmp.eq.s32.totalorder %s13, 0
      %p75 = por %p73, %p74
      %p76 = scmp.ne.s32.totalorder %s68, %s70
      %p77 = scmp.eq.s32.totalorder %s18, 1
      %p78 = por %p76, %p77
      %p79 = scmp.ne.s32.totalorder %s70, %s71
      %p80 = scmp.eq.s32.totalorder %s18, 0
      %p81 = por %p79, %p80
      %p82 = scmp.ne.s32.totalorder %s70, %s71
      %p83 = scmp.eq.s32.totalorder %s19, 1
      %p84 = por %p82, %p83
      %p86 = scmp.ne.s32.totalorder %s71, %s85
      %p87 = scmp.eq.s32.totalorder %s19, 0
      %p88 = por %p86, %p87
      %s90 = sadd.s32 %s89, 1
      %p93 = scmp.eq.s32.totalorder %s13, 1
      %p94 = scmp.ne.s32.totalorder %s89, %s91
      %p95 = scmp.eq.s32.totalorder %s13, 0
      %p96 = por %p94, %p95
      %p97 = scmp.ne.s32.totalorder %s89, %s91
      %p98 = scmp.eq.s32.totalorder %s18, 1
      %p99 = por %p97, %p98
      %p100 = scmp.ne.s32.totalorder %s91, %s92
      %p101 = scmp.eq.s32.totalorder %s18, 0
      %p102 = por %p100, %p101
      %p103 = scmp.ne.s32.totalorder %s91, %s92
      %p104 = scmp.eq.s32.totalorder %s19, 1
      %p105 = por %p103, %p104
      %p107 = scmp.ne.s32.totalorder %s92, %s106
      %p108 = scmp.eq.s32.totalorder %s19, 0
      %p109 = por %p107, %p108
      %s110 = ssub.s32 %s13, %s20
      %p111 = scmp.eq.s32.totalorder %s110, 0
      %s113 = sadd.s32 %s112, 1
      %s114 = scalar_select %p111, %s112, %s113
      %p117 = pneg %p111
      %p118 = scmp.eq.s32.totalorder %s13, 1
      %p119 = por %p117, %p118
      %p120 = scmp.ne.s32.totalorder %s112, %s115
      %p121 = scmp.eq.s32.totalorder %s13, 0
      %p122 = por %p120, %p121
      %p123 = scmp.ne.s32.totalorder %s112, %s115
      %p124 = scmp.eq.s32.totalorder %s18, 1
      %p125 = por %p123, %p124
      %p126 = scmp.ne.s32.totalorder %s115, %s116
      %p127 = scmp.eq.s32.totalorder %s18, 0
      %p128 = por %p126, %p127
      %p129 = scmp.ne.s32.totalorder %s115, %s116
      %p130 = scmp.eq.s32.totalorder %s19, 1
      %p131 = por %p129, %p130
      %p133 = scmp.ne.s32.totalorder %s116, %s132
      %p134 = scmp.eq.s32.totalorder %s19, 0
      %p135 = por %p133, %p134
      %p136 = scmp.le.s32.totalorder 1, %s13
      %p137 = scmp.lt.s32.totalorder %s13, 3
      %p138 = pnand %p136, %p137
      %p139 = pneg %p138
      // Predicated region
      $region9: #{tpu_custom_call.1} parent=5 // pred_check
        _
      $region10: #{tpu_custom_call.1} parent=5 // pred_check_branch
        %141 = sbr.rel (%p138) target = $region12
      $region11: #{tpu_custom_call.1} parent=5 // pred_region
        %s142 = ssub.s32 %s13, 1
        // Predicated region
        $region13: #{tpu_custom_call.1} parent=11 // pred_check
          %p143 = pneg %p60
        $region14: #{tpu_custom_call.1} parent=11 // pred_check_branch
          %145 = sbr.rel (%p143) target = $region16
        $region15: #{tpu_custom_call.1} parent=11 // pred_region
          _
        $region16: #{tpu_custom_call.1} parent=11 // pred_fallthru
          _
        // Predicated region
        $region17: #{tpu_custom_call.1} parent=11 // pred_check
          %p146 = pneg %p81
        $region18: #{tpu_custom_call.1} parent=11 // pred_check_branch
          %148 = sbr.rel (%p146) target = $region20
        $region19: #{tpu_custom_call.1} parent=11 // pred_region
          _
        $region20: #{tpu_custom_call.1} parent=11 // pred_fallthru
          _
        // Predicated region
        $region21: #{tpu_custom_call.1} parent=11 // pred_check
          %p149 = pneg %p102
        $region22: #{tpu_custom_call.1} parent=11 // pred_check_branch
          %151 = sbr.rel (%p149) target = $region24
        $region23: #{tpu_custom_call.1} parent=11 // pred_region
          _
        $region24: #{tpu_custom_call.1} parent=11 // pred_fallthru
          _
      $region12: #{tpu_custom_call.1} parent=5 // pred_fallthru
        _
      %p152 = scmp.lt.s32.totalorder %s13, 2
      // Predicated region
      $region25: #{tpu_custom_call.1} parent=5 // pred_check
        %p153 = pneg %p152
      $region26: #{tpu_custom_call.1} parent=5 // pred_check_branch
        %155 = sbr.rel (%p153) target = $region28
      $region27: #{tpu_custom_call.1} parent=5 // pred_region
        // Predicated region
        $region29: #{tpu_custom_call.1} parent=27 // pred_check
          %p156 = pneg %p33
        $region30: #{tpu_custom_call.1} parent=27 // pred_check_branch
          %158 = sbr.rel (%p156) target = $region32
        $region31: #{tpu_custom_call.1} parent=27 // pred_region
          %p159 = scmp.lt.s32.totalorder %s13, 1
          %s160 = scalar_select %p159, %s13, 1
          %s161 = smul.addr %s160, 8
          %s162 = scalar_lea.vmem %s0, %s161
        $region32: #{tpu_custom_call.1} parent=27 // pred_fallthru
          _
      $region28: #{tpu_custom_call.1} parent=5 // pred_fallthru
        _
      %p163 = scmp.le.s32.totalorder 1, %s13
      %p164 = scmp.lt.s32.totalorder %s13, 3
      %p165 = pnand %p163, %p164
      %p166 = pneg %p165
      // Predicated region
      $region33: #{tpu_custom_call.1} parent=5 // pred_check
        _
      $region34: #{tpu_custom_call.1} parent=5 // pred_check_branch
        %168 = sbr.rel (%p165) target = $region36
      $region35: #{tpu_custom_call.1} parent=5 // pred_region
        %s169 = ssub.s32 %s13, 1
        %p170 = scmp.lt.s32.totalorder %s18, 1
        %s171 = scalar_select %p170, %s18, 1
        %s172 = smul.addr %s171, 8
        %s173 = scalar_lea.vmem %s0, %s172
        %p174 = pneg %p39
        %p175 = pneg %p36
        %p176 = pneg %p60
        %p177 = pneg %p57
        %p178 = pneg %p81
        %p179 = pneg %p78
        %p180 = pneg %p102
        %p181 = pneg %p99
        %p182 = pneg %p128
        %p183 = pneg %p125
        %s184 = sand.u32 %s115, 1
        %s185 = scalar_lea.sflag [#allocation3], %s184
        %s186 = sand.u32 %s115, 1
        %s187 = smul.addr %s186, 8
        %s188 = scalar_lea.vmem [#allocation2], %s187
        %p189 = scmp.lt.s32.totalorder %s18, 1
        %s190 = scalar_select %p189, %s18, 1
        %s191 = smul.addr %s190, 8
        %s192 = scalar_lea.vmem %s0, %s191
        %v193 = vld [vmem:[%s192] sm:$0xff]
        %v194 = vld [vmem:[%s1] sm:$0xff]
        %v195 = vld [vmem:[%s1 + $0x8] sm:$0xff]
        %v196 = vld [vmem:[%s1 + $0x10] sm:$0xff]
        %v197 = vld [vmem:[%s1 + $0x18] sm:$0xff]
        %v198 = vld [vmem:[%s1 + $0x20] sm:$0xff]
        %v199 = vld [vmem:[%s1 + $0x28] sm:$0xff]
        %v200 = vld [vmem:[%s1 + $0x30] sm:$0xff]
        %v201 = vld [vmem:[%s1 + $0x38] sm:$0xff]
        %v202 = vld [vmem:[%s1 + $0x40] sm:$0xff]
        %v203 = vld [vmem:[%s1 + $0x48] sm:$0xff]
        %v204 = vld [vmem:[%s1 + $0x50] sm:$0xff]
        %v205 = vld [vmem:[%s1 + $0x58] sm:$0xff]
        %v206 = vld [vmem:[%s1 + $0x60] sm:$0xff]
        %v207 = vld [vmem:[%s1 + $0x68] sm:$0xff]
        %v208 = vld [vmem:[%s1 + $0x70] sm:$0xff]
        %v209 = vld [vmem:[%s1 + $0x78] sm:$0xff]
        %v210 = vld [vmem:[%s1 + $0x80] sm:$0xff]
        %v211 = vld [vmem:[%s1 + $0x88] sm:$0xff]
        %v212 = vld [vmem:[%s1 + $0x90] sm:$0xff]
        %v213 = vld [vmem:[%s1 + $0x98] sm:$0xff]
        %v214 = vld [vmem:[%s1 + $0xa0] sm:$0xff]
        %v215 = vld [vmem:[%s1 + $0xa8] sm:$0xff]
        %v216 = vld [vmem:[%s1 + $0xb0] sm:$0xff]
        %v217 = vld [vmem:[%s1 + $0xb8] sm:$0xff]
        %v218 = vld [vmem:[%s1 + $0xc0] sm:$0xff]
        %v219 = vld [vmem:[%s1 + $0xc8] sm:$0xff]
        %v220 = vld [vmem:[%s1 + $0xd0] sm:$0xff]
        %v221 = vld [vmem:[%s1 + $0xd8] sm:$0xff]
        %v222 = vld [vmem:[%s1 + $0xe0] sm:$0xff]
        %v223 = vld [vmem:[%s1 + $0xe8] sm:$0xff]
        %v224 = vld [vmem:[%s1 + $0xf0] sm:$0xff]
        %v225 = vld [vmem:[%s1 + $0xf8] sm:$0xff]
        %v226 = vld [vmem:[%s1 + $0x100] sm:$0xff]
        %v227 = vld [vmem:[%s1 + $0x108] sm:$0xff]
        %v228 = vld [vmem:[%s1 + $0x110] sm:$0xff]
        %v229 = vld [vmem:[%s1 + $0x118] sm:$0xff]
        %v230 = vld [vmem:[%s1 + $0x120] sm:$0xff]
        %v231 = vld [vmem:[%s1 + $0x128] sm:$0xff]
        %v232 = vld [vmem:[%s1 + $0x130] sm:$0xff]
        %v233 = vld [vmem:[%s1 + $0x138] sm:$0xff]
        %v234 = vld [vmem:[%s1 + $0x140] sm:$0xff]
        %v235 = vld [vmem:[%s1 + $0x148] sm:$0xff]
        %v236 = vld [vmem:[%s1 + $0x150] sm:$0xff]
        %v237 = vld [vmem:[%s1 + $0x158] sm:$0xff]
        %v238 = vld [vmem:[%s1 + $0x160] sm:$0xff]
        %v239 = vld [vmem:[%s1 + $0x168] sm:$0xff]
        %v240 = vld [vmem:[%s1 + $0x170] sm:$0xff]
        %v241 = vld [vmem:[%s1 + $0x178] sm:$0xff]
        %vm242 = vcmask 261120
        %v244 = vsel %vm242, %v193, 0
        %246 = vmatpush.msra.mxu0 0.0
        %247 = vmatpush.msra.mxu0 0.0
        %248 = vmatpush.msra.mxu0 0.0
        %249 = vmatpush.msra.mxu0 0.0
        %250 = vmatpush.msra.mxu0 0.0
        %251 = vmatpush.msra.mxu0 0.0
        %252 = vmatpush.msra.mxu0 0.0
        %253 = vmatpush.msra.mxu0 0.0
        %254 = vmatpush.msra.mxu0 0.0
        %255 = vmatpush.msra.mxu0 0.0
        %256 = vmatpush.msra.mxu0 0.0
        %257 = vmatpush.msra.mxu0 0.0
        %258 = vmatpush.msra.mxu0 %v197
        %259 = vmatpush.msra.mxu0 %v196
        %260 = vmatpush.msra.mxu0 %v195
        %261 = vmatpush.msra.mxu0 %v194
        %262 = vmatmul.f32.gmra.mxu0 %v244
        %v263 = vpop.f32.mrf.mxu0
        %v264 = vadd.f32 0.0, %v263
        %265 = vdwg.mxu0
        %266 = vmatpush.msra.mxu0 0.0
        %267 = vmatpush.msra.mxu0 0.0
        %268 = vmatpush.msra.mxu0 0.0
        %269 = vmatpush.msra.mxu0 0.0
        %270 = vmatpush.msra.mxu0 0.0
        %271 = vmatpush.msra.mxu0 0.0
        %272 = vmatpush.msra.mxu0 0.0
        %273 = vmatpush.msra.mxu0 0.0
        %274 = vmatpush.msra.mxu0 0.0
        %275 = vmatpush.msra.mxu0 0.0
        %276 = vmatpush.msra.mxu0 0.0
        %277 = vmatpush.msra.mxu0 0.0
        %278 = vmatpush.msra.mxu0 %v201
        %279 = vmatpush.msra.mxu0 %v200
        %280 = vmatpush.msra.mxu0 %v199
        %281 = vmatpush.msra.mxu0 %v198
        %282 = vmatmul.f32.gmra.mxu0 %v244
        %v283 = vpop.f32.mrf.mxu0
        %v284 = vadd.f32 0.0, %v283
        %285 = vdwg.mxu0
        %286 = vmatpush.msra.mxu0 0.0
        %287 = vmatpush.msra.mxu0 0.0
        %288 = vmatpush.msra.mxu0 0.0
        %289 = vmatpush.msra.mxu0 0.0
        %290 = vmatpush.msra.mxu0 0.0
        %291 = vmatpush.msra.mxu0 0.0
        %292 = vmatpush.msra.mxu0 0.0
        %293 = vmatpush.msra.mxu0 0.0
        %294 = vmatpush.msra.mxu0 0.0
        %295 = vmatpush.msra.mxu0 0.0
        %296 = vmatpush.msra.mxu0 0.0
        %297 = vmatpush.msra.mxu0 0.0
        %298 = vmatpush.msra.mxu0 %v205
        %299 = vmatpush.msra.mxu0 %v204
        %300 = vmatpush.msra.mxu0 %v203
        %301 = vmatpush.msra.mxu0 %v202
        %302 = vmatmul.f32.gmra.mxu0 %v244
        %v303 = vpop.f32.mrf.mxu0
        %v304 = vadd.f32 0.0, %v303
        %305 = vdwg.mxu0
        %306 = vmatpush.msra.mxu0 0.0
        %307 = vmatpush.msra.mxu0 0.0
        %308 = vmatpush.msra.mxu0 0.0
        %309 = vmatpush.msra.mxu0 0.0
        %310 = vmatpush.msra.mxu0 0.0
        %311 = vmatpush.msra.mxu0 0.0
        %312 = vmatpush.msra.mxu0 0.0
        %313 = vmatpush.msra.mxu0 0.0
        %314 = vmatpush.msra.mxu0 0.0
        %315 = vmatpush.msra.mxu0 0.0
        %316 = vmatpush.msra.mxu0 0.0
        %317 = vmatpush.msra.mxu0 0.0
        %318 = vmatpush.msra.mxu0 %v209
        %319 = vmatpush.msra.mxu0 %v208
        %320 = vmatpush.msra.mxu0 %v207
        %321 = vmatpush.msra.mxu0 %v206
        %322 = vmatmul.f32.gmra.mxu0 %v244
        %v323 = vpop.f32.mrf.mxu0
        %v324 = vadd.f32 0.0, %v323
        %325 = vdwg.mxu0
        %326 = vmatpush.msra.mxu0 0.0
        %327 = vmatpush.msra.mxu0 0.0
        %328 = vmatpush.msra.mxu0 0.0
        %329 = vmatpush.msra.mxu0 0.0
        %330 = vmatpush.msra.mxu0 0.0
        %331 = vmatpush.msra.mxu0 0.0
        %332 = vmatpush.msra.mxu0 0.0
        %333 = vmatpush.msra.mxu0 0.0
        %334 = vmatpush.msra.mxu0 0.0
        %335 = vmatpush.msra.mxu0 0.0
        %336 = vmatpush.msra.mxu0 0.0
        %337 = vmatpush.msra.mxu0 0.0
        %338 = vmatpush.msra.mxu0 %v213
        %339 = vmatpush.msra.mxu0 %v212
        %340 = vmatpush.msra.mxu0 %v211
        %341 = vmatpush.msra.mxu0 %v210
        %342 = vmatmul.f32.gmra.mxu0 %v244
        %v343 = vpop.f32.mrf.mxu0
        %v344 = vadd.f32 0.0, %v343
        %345 = vdwg.mxu0
        %346 = vmatpush.msra.mxu0 0.0
        %347 = vmatpush.msra.mxu0 0.0
        %348 = vmatpush.msra.mxu0 0.0
        %349 = vmatpush.msra.mxu0 0.0
        %350 = vmatpush.msra.mxu0 0.0
        %351 = vmatpush.msra.mxu0 0.0
        %352 = vmatpush.msra.mxu0 0.0
        %353 = vmatpush.msra.mxu0 0.0
        %354 = vmatpush.msra.mxu0 0.0
        %355 = vmatpush.msra.mxu0 0.0
        %356 = vmatpush.msra.mxu0 0.0
        %357 = vmatpush.msra.mxu0 0.0
        %358 = vmatpush.msra.mxu0 %v217
        %359 = vmatpush.msra.mxu0 %v216
        %360 = vmatpush.msra.mxu0 %v215
        %361 = vmatpush.msra.mxu0 %v214
        %362 = vmatmul.f32.gmra.mxu0 %v244
        %v363 = vpop.f32.mrf.mxu0
        %v364 = vadd.f32 0.0, %v363
        %365 = vdwg.mxu0
        %366 = vmatpush.msra.mxu0 0.0
        %367 = vmatpush.msra.mxu0 0.0
        %368 = vmatpush.msra.mxu0 0.0
        %369 = vmatpush.msra.mxu0 0.0
        %370 = vmatpush.msra.mxu0 0.0
        %371 = vmatpush.msra.mxu0 0.0
        %372 = vmatpush.msra.mxu0 0.0
        %373 = vmatpush.msra.mxu0 0.0
        %374 = vmatpush.msra.mxu0 0.0
        %375 = vmatpush.msra.mxu0 0.0
        %376 = vmatpush.msra.mxu0 0.0
        %377 = vmatpush.msra.mxu0 0.0
        %378 = vmatpush.msra.mxu0 %v221
        %379 = vmatpush.msra.mxu0 %v220
        %380 = vmatpush.msra.mxu0 %v219
        %381 = vmatpush.msra.mxu0 %v218
        %382 = vmatmul.f32.gmra.mxu0 %v244
        %v383 = vpop.f32.mrf.mxu0
        %v384 = vadd.f32 0.0, %v383
        %385 = vdwg.mxu0
        %386 = vmatpush.msra.mxu0 0.0
        %387 = vmatpush.msra.mxu0 0.0
        %388 = vmatpush.msra.mxu0 0.0
        %389 = vmatpush.msra.mxu0 0.0
        %390 = vmatpush.msra.mxu0 0.0
        %391 = vmatpush.msra.mxu0 0.0
        %392 = vmatpush.msra.mxu0 0.0
        %393 = vmatpush.msra.mxu0 0.0
        %394 = vmatpush.msra.mxu0 0.0
        %395 = vmatpush.msra.mxu0 0.0
        %396 = vmatpush.msra.mxu0 0.0
        %397 = vmatpush.msra.mxu0 0.0
        %398 = vmatpush.msra.mxu0 %v225
        %399 = vmatpush.msra.mxu0 %v224
        %400 = vmatpush.msra.mxu0 %v223
        %401 = vmatpush.msra.mxu0 %v222
        %402 = vmatmul.f32.gmra.mxu0 %v244
        %v403 = vpop.f32.mrf.mxu0
        %v404 = vadd.f32 0.0, %v403
        %405 = vdwg.mxu0
        %406 = vmatpush.msra.mxu0 0.0
        %407 = vmatpush.msra.mxu0 0.0
        %408 = vmatpush.msra.mxu0 0.0
        %409 = vmatpush.msra.mxu0 0.0
        %410 = vmatpush.msra.mxu0 0.0
        %411 = vmatpush.msra.mxu0 0.0
        %412 = vmatpush.msra.mxu0 0.0
        %413 = vmatpush.msra.mxu0 0.0
        %414 = vmatpush.msra.mxu0 0.0
        %415 = vmatpush.msra.mxu0 0.0
        %416 = vmatpush.msra.mxu0 0.0
        %417 = vmatpush.msra.mxu0 0.0
        %418 = vmatpush.msra.mxu0 %v229
        %419 = vmatpush.msra.mxu0 %v228
        %420 = vmatpush.msra.mxu0 %v227
        %421 = vmatpush.msra.mxu0 %v226
        %422 = vmatmul.f32.gmra.mxu0 %v244
        %v423 = vpop.f32.mrf.mxu0
        %v424 = vadd.f32 0.0, %v423
        %425 = vdwg.mxu0
        %426 = vmatpush.msra.mxu0 0.0
        %427 = vmatpush.msra.mxu0 0.0
        %428 = vmatpush.msra.mxu0 0.0
        %429 = vmatpush.msra.mxu0 0.0
        %430 = vmatpush.msra.mxu0 0.0
        %431 = vmatpush.msra.mxu0 0.0
        %432 = vmatpush.msra.mxu0 0.0
        %433 = vmatpush.msra.mxu0 0.0
        %434 = vmatpush.msra.mxu0 0.0
        %435 = vmatpush.msra.mxu0 0.0
        %436 = vmatpush.msra.mxu0 0.0
        %437 = vmatpush.msra.mxu0 0.0
        %438 = vmatpush.msra.mxu0 %v233
        %439 = vmatpush.msra.mxu0 %v232
        %440 = vmatpush.msra.mxu0 %v231
        %441 = vmatpush.msra.mxu0 %v230
        %442 = vmatmul.f32.gmra.mxu0 %v244
        %v443 = vpop.f32.mrf.mxu0
        %v444 = vadd.f32 0.0, %v443
        %445 = vdwg.mxu0
        %446 = vmatpush.msra.mxu0 0.0
        %447 = vmatpush.msra.mxu0 0.0
        %448 = vmatpush.msra.mxu0 0.0
        %449 = vmatpush.msra.mxu0 0.0
        %450 = vmatpush.msra.mxu0 0.0
        %451 = vmatpush.msra.mxu0 0.0
        %452 = vmatpush.msra.mxu0 0.0
        %453 = vmatpush.msra.mxu0 0.0
        %454 = vmatpush.msra.mxu0 0.0
        %455 = vmatpush.msra.mxu0 0.0
        %456 = vmatpush.msra.mxu0 0.0
        %457 = vmatpush.msra.mxu0 0.0
        %458 = vmatpush.msra.mxu0 %v237
        %459 = vmatpush.msra.mxu0 %v236
        %460 = vmatpush.msra.mxu0 %v235
        %461 = vmatpush.msra.mxu0 %v234
        %462 = vmatmul.f32.gmra.mxu0 %v244
        %v463 = vpop.f32.mrf.mxu0
        %v464 = vadd.f32 0.0, %v463
        %465 = vdwg.mxu0
        %466 = vmatpush.msra.mxu0 0.0
        %467 = vmatpush.msra.mxu0 0.0
        %468 = vmatpush.msra.mxu0 0.0
        %469 = vmatpush.msra.mxu0 0.0
        %470 = vmatpush.msra.mxu0 0.0
        %471 = vmatpush.msra.mxu0 0.0
        %472 = vmatpush.msra.mxu0 0.0
        %473 = vmatpush.msra.mxu0 0.0
        %474 = vmatpush.msra.mxu0 0.0
        %475 = vmatpush.msra.mxu0 0.0
        %476 = vmatpush.msra.mxu0 0.0
        %477 = vmatpush.msra.mxu0 0.0
        %478 = vmatpush.msra.mxu0 %v241
        %479 = vmatpush.msra.mxu0 %v240
        %480 = vmatpush.msra.mxu0 %v239
        %481 = vmatpush.msra.mxu0 %v238
        %482 = vmatmul.f32.gmra.mxu0 %v244
        %v483 = vpop.f32.mrf.mxu0
        %v484 = vadd.f32 0.0, %v483
        %485 = vdwg.mxu0
        %vm486 = vcmask 64512
        %v488 = vsel %vm486, %v264, 0
        %v491 = vsel %vm486, %v344, 0
        %493 = vmatpush.xpose.msra.mxu0 0.0
        %494 = vmatpush.xpose.msra.mxu0 0.0
        %495 = vmatpush.xpose.msra.mxu0 0.0
        %496 = vmatpush.xpose.msra.mxu0 0.0
        %497 = vmatpush.xpose.msra.mxu0 0.0
        %498 = vmatpush.xpose.msra.mxu0 0.0
        %499 = vmatpush.xpose.msra.mxu0 0.0
        %500 = vmatpush.xpose.msra.mxu0 0.0
        %501 = vmatpush.xpose.msra.mxu0 0.0
        %502 = vmatpush.xpose.msra.mxu0 0.0
        %503 = vmatpush.xpose.msra.mxu0 0.0
        %504 = vmatpush.xpose.msra.mxu0 0.0
        %505 = vmatpush.xpose.msra.mxu0 0.0
        %506 = vmatpush.xpose.msra.mxu0 0.0
        %507 = vmatpush.xpose.msra.mxu0 0.0
        %508 = vmatpush.xpose.msra.mxu0 %v491
        %509 = vmatmul.f32.gmra.mxu0 %v488
        %v510 = vpop.f32.mrf.mxu0
        %v511 = vadd.f32 0.0, %v510
        %512 = vdwg.mxu0
        %v514 = vsel %vm486, %v284, 0
        %v517 = vsel %vm486, %v364, 0
        %519 = vmatpush.xpose.msra.mxu0 0.0
        %520 = vmatpush.xpose.msra.mxu0 0.0
        %521 = vmatpush.xpose.msra.mxu0 0.0
        %522 = vmatpush.xpose.msra.mxu0 0.0
        %523 = vmatpush.xpose.msra.mxu0 0.0
        %524 = vmatpush.xpose.msra.mxu0 0.0
        %525 = vmatpush.xpose.msra.mxu0 0.0
        %526 = vmatpush.xpose.msra.mxu0 0.0
        %527 = vmatpush.xpose.msra.mxu0 0.0
        %528 = vmatpush.xpose.msra.mxu0 0.0
        %529 = vmatpush.xpose.msra.mxu0 0.0
        %530 = vmatpush.xpose.msra.mxu0 0.0
        %531 = vmatpush.xpose.msra.mxu0 0.0
        %532 = vmatpush.xpose.msra.mxu0 0.0
        %533 = vmatpush.xpose.msra.mxu0 0.0
        %534 = vmatpush.xpose.msra.mxu0 %v517
        %535 = vmatmul.f32.gmra.mxu0 %v514
        %v536 = vpop.f32.mrf.mxu0
        %v537 = vadd.f32 0.0, %v536
        %538 = vdwg.mxu0
        %v540 = vsel %vm486, %v304, 0
        %v543 = vsel %vm486, %v384, 0
        %545 = vmatpush.xpose.msra.mxu0 0.0
        %546 = vmatpush.xpose.msra.mxu0 0.0
        %547 = vmatpush.xpose.msra.mxu0 0.0
        %548 = vmatpush.xpose.msra.mxu0 0.0
        %549 = vmatpush.xpose.msra.mxu0 0.0
        %550 = vmatpush.xpose.msra.mxu0 0.0
        %551 = vmatpush.xpose.msra.mxu0 0.0
        %552 = vmatpush.xpose.msra.mxu0 0.0
        %553 = vmatpush.xpose.msra.mxu0 0.0
        %554 = vmatpush.xpose.msra.mxu0 0.0
        %555 = vmatpush.xpose.msra.mxu0 0.0
        %556 = vmatpush.xpose.msra.mxu0 0.0
        %557 = vmatpush.xpose.msra.mxu0 0.0
        %558 = vmatpush.xpose.msra.mxu0 0.0
        %559 = vmatpush.xpose.msra.mxu0 0.0
        %560 = vmatpush.xpose.msra.mxu0 %v543
        %561 = vmatmul.f32.gmra.mxu0 %v540
        %v562 = vpop.f32.mrf.mxu0
        %v563 = vadd.f32 0.0, %v562
        %564 = vdwg.mxu0
        %v566 = vsel %vm486, %v324, 0
        %v569 = vsel %vm486, %v404, 0
        %571 = vmatpush.xpose.msra.mxu0 0.0
        %572 = vmatpush.xpose.msra.mxu0 0.0
        %573 = vmatpush.xpose.msra.mxu0 0.0
        %574 = vmatpush.xpose.msra.mxu0 0.0
        %575 = vmatpush.xpose.msra.mxu0 0.0
        %576 = vmatpush.xpose.msra.mxu0 0.0
        %577 = vmatpush.xpose.msra.mxu0 0.0
        %578 = vmatpush.xpose.msra.mxu0 0.0
        %579 = vmatpush.xpose.msra.mxu0 0.0
        %580 = vmatpush.xpose.msra.mxu0 0.0
        %581 = vmatpush.xpose.msra.mxu0 0.0
        %582 = vmatpush.xpose.msra.mxu0 0.0
        %583 = vmatpush.xpose.msra.mxu0 0.0
        %584 = vmatpush.xpose.msra.mxu0 0.0
        %585 = vmatpush.xpose.msra.mxu0 0.0
        %586 = vmatpush.xpose.msra.mxu0 %v569
        %587 = vmatmul.f32.gmra.mxu0 %v566
        %v588 = vpop.f32.mrf.mxu0
        %v589 = vadd.f32 0.0, %v588
        %590 = vdwg.mxu0
        %v591 = vsel %vm486, %v511, -inf
        %592 = vmax.xlane.f32.xlu0 %v591
        %v593 = vpop.xlane.xlu0 %592
        %v594 = vsel %vm486, %v537, -inf
        %595 = vmax.xlane.f32.xlu0 %v594
        %v596 = vpop.xlane.xlu0 %595
        %v597 = vsel %vm486, %v563, -inf
        %598 = vmax.xlane.f32.xlu0 %v597
        %v599 = vpop.xlane.xlu0 %598
        %v600 = vsel %vm486, %v589, -inf
        %601 = vmax.xlane.f32.xlu0 %v600
        %v602 = vpop.xlane.xlu0 %601
        %v603 = vsub.f32 %v511, %v593
        %v604 = vsub.f32 %v537, %v596
        %v605 = vsub.f32 %v563, %v599
        %v606 = vsub.f32 %v589, %v602
        %v607 = vmul.f32 %v603, 1.442695
        %v608 = vpow.pop %v607
        %v609 = vmul.f32 %v604, 1.442695
        %v610 = vpow.pop %v609
        %v611 = vmul.f32 %v605, 1.442695
        %v612 = vpow.pop %v611
        %v613 = vmul.f32 %v606, 1.442695
        %v614 = vpow.pop %v613
        %v615 = vsel %vm486, %v608, 0.0
        %616 = vadd.xlane.f32.xlu0 %v615
        %v617 = vpop.xlane.xlu0 %616
        %v618 = vsel %vm486, %v610, 0.0
        %619 = vadd.xlane.f32.xlu0 %v618
        %v620 = vpop.xlane.xlu0 %619
        %v621 = vsel %vm486, %v612, 0.0
        %622 = vadd.xlane.f32.xlu0 %v621
        %v623 = vpop.xlane.xlu0 %622
        %v624 = vsel %vm486, %v614, 0.0
        %625 = vadd.xlane.f32.xlu0 %v624
        %v626 = vpop.xlane.xlu0 %625
        %v627 = vrcp.pop %v617
        %v628 = vmul.f32 %v617, %v627
        %v629 = vsub.f32 1.0, %v628
        %v630 = vmul.f32 %v627, %v629
        %v631 = vadd.f32 %v627, %v630
        %vm632 = vweird.f32 %v617
        %vm633 = vweird.f32 %v627
        %vm634 = vmor %vm632, %vm633
        %v635 = vsel %vm634, %v627, %v631
        %v636 = vand.u32 2147483647, %v617
        %vm637 = vcmp.eq.f32.partialorder %v636, 8.507059e+37
        %v638 = vand.u32 %v617, 2147483648
        %v639 = vor.u32 1.1754944e-38, %v638
        %v640 = vsel %vm637, %v639, %v635
        %v641 = vrcp.pop %v620
        %v642 = vmul.f32 %v620, %v641
        %v643 = vsub.f32 1.0, %v642
        %v644 = vmul.f32 %v641, %v643
        %v645 = vadd.f32 %v641, %v644
        %vm646 = vweird.f32 %v620
        %vm647 = vweird.f32 %v641
        %vm648 = vmor %vm646, %vm647
        %v649 = vsel %vm648, %v641, %v645
        %v650 = vand.u32 2147483647, %v620
        %vm651 = vcmp.eq.f32.partialorder %v650, 8.507059e+37
        %v652 = vand.u32 %v620, 2147483648
        %v653 = vor.u32 1.1754944e-38, %v652
        %v654 = vsel %vm651, %v653, %v649
        %v655 = vrcp.pop %v623
        %v656 = vmul.f32 %v623, %v655
        %v657 = vsub.f32 1.0, %v656
        %v658 = vmul.f32 %v655, %v657
        %v659 = vadd.f32 %v655, %v658
        %vm660 = vweird.f32 %v623
        %vm661 = vweird.f32 %v655
        %vm662 = vmor %vm660, %vm661
        %v663 = vsel %vm662, %v655, %v659
        %v664 = vand.u32 2147483647, %v623
        %vm665 = vcmp.eq.f32.partialorder %v664, 8.507059e+37
        %v666 = vand.u32 %v623, 2147483648
        %v667 = vor.u32 1.1754944e-38, %v666
        %v668 = vsel %vm665, %v667, %v663
        %v669 = vrcp.pop %v626
        %v670 = vmul.f32 %v626, %v669
        %v671 = vsub.f32 1.0, %v670
        %v672 = vmul.f32 %v669, %v671
        %v673 = vadd.f32 %v669, %v672
        %vm674 = vweird.f32 %v626
        %vm675 = vweird.f32 %v669
        %vm676 = vmor %vm674, %vm675
        %v677 = vsel %vm676, %v669, %v673
        %v678 = vand.u32 2147483647, %v626
        %vm679 = vcmp.eq.f32.partialorder %v678, 8.507059e+37
        %v680 = vand.u32 %v626, 2147483648
        %v681 = vor.u32 1.1754944e-38, %v680
        %v682 = vsel %vm679, %v681, %v677
        %v683 = vmul.f32 %v608, %v640
        %v684 = vmul.f32 %v610, %v654
        %v685 = vmul.f32 %v612, %v668
        %v686 = vmul.f32 %v614, %v682
        %v688 = vsel %vm486, %v683, 0
        %690 = vmatpush.msra.mxu0 0.0
        %691 = vmatpush.msra.mxu0 0.0
        %692 = vmatpush.msra.mxu0 0.0
        %693 = vmatpush.msra.mxu0 0.0
        %694 = vmatpush.msra.mxu0 0.0
        %695 = vmatpush.msra.mxu0 0.0
        %696 = vmatpush.msra.mxu0 0.0
        %697 = vmatpush.msra.mxu0 0.0
        %698 = vmatpush.msra.mxu0 0.0
        %699 = vmatpush.msra.mxu0 0.0
        %700 = vmatpush.msra.mxu0 0.0
        %701 = vmatpush.msra.mxu0 0.0
        %702 = vmatpush.msra.mxu0 0.0
        %703 = vmatpush.msra.mxu0 0.0
        %704 = vmatpush.msra.mxu0 0.0
        %705 = vmatpush.msra.mxu0 %v424
        %706 = vmatmul.f32.gmra.mxu0 %v688
        %v707 = vpop.f32.mrf.mxu0
        %v708 = vadd.f32 0.0, %v707
        %709 = vdwg.mxu0
        %v711 = vsel %vm486, %v684, 0
        %713 = vmatpush.msra.mxu0 0.0
        %714 = vmatpush.msra.mxu0 0.0
        %715 = vmatpush.msra.mxu0 0.0
        %716 = vmatpush.msra.mxu0 0.0
        %717 = vmatpush.msra.mxu0 0.0
        %718 = vmatpush.msra.mxu0 0.0
        %719 = vmatpush.msra.mxu0 0.0
        %720 = vmatpush.msra.mxu0 0.0
        %721 = vmatpush.msra.mxu0 0.0
        %722 = vmatpush.msra.mxu0 0.0
        %723 = vmatpush.msra.mxu0 0.0
        %724 = vmatpush.msra.mxu0 0.0
        %725 = vmatpush.msra.mxu0 0.0
        %726 = vmatpush.msra.mxu0 0.0
        %727 = vmatpush.msra.mxu0 0.0
        %728 = vmatpush.msra.mxu0 %v444
        %729 = vmatmul.f32.gmra.mxu0 %v711
        %v730 = vpop.f32.mrf.mxu0
        %v731 = vadd.f32 0.0, %v730
        %732 = vdwg.mxu0
        %v734 = vsel %vm486, %v685, 0
        %736 = vmatpush.msra.mxu0 0.0
        %737 = vmatpush.msra.mxu0 0.0
        %738 = vmatpush.msra.mxu0 0.0
        %739 = vmatpush.msra.mxu0 0.0
        %740 = vmatpush.msra.mxu0 0.0
        %741 = vmatpush.msra.mxu0 0.0
        %742 = vmatpush.msra.mxu0 0.0
        %743 = vmatpush.msra.mxu0 0.0
        %744 = vmatpush.msra.mxu0 0.0
        %745 = vmatpush.msra.mxu0 0.0
        %746 = vmatpush.msra.mxu0 0.0
        %747 = vmatpush.msra.mxu0 0.0
        %748 = vmatpush.msra.mxu0 0.0
        %749 = vmatpush.msra.mxu0 0.0
        %750 = vmatpush.msra.mxu0 0.0
        %751 = vmatpush.msra.mxu0 %v464
        %752 = vmatmul.f32.gmra.mxu0 %v734
        %v753 = vpop.f32.mrf.mxu0
        %v754 = vadd.f32 0.0, %v753
        %755 = vdwg.mxu0
        %v757 = vsel %vm486, %v686, 0
        %759 = vmatpush.msra.mxu0 0.0
        %760 = vmatpush.msra.mxu0 0.0
        %761 = vmatpush.msra.mxu0 0.0
        %762 = vmatpush.msra.mxu0 0.0
        %763 = vmatpush.msra.mxu0 0.0
        %764 = vmatpush.msra.mxu0 0.0
        %765 = vmatpush.msra.mxu0 0.0
        %766 = vmatpush.msra.mxu0 0.0
        %767 = vmatpush.msra.mxu0 0.0
        %768 = vmatpush.msra.mxu0 0.0
        %769 = vmatpush.msra.mxu0 0.0
        %770 = vmatpush.msra.mxu0 0.0
        %771 = vmatpush.msra.mxu0 0.0
        %772 = vmatpush.msra.mxu0 0.0
        %773 = vmatpush.msra.mxu0 0.0
        %774 = vmatpush.msra.mxu0 %v484
        %775 = vmatmul.f32.gmra.mxu0 %v757
        %v776 = vpop.f32.mrf.mxu0
        %v777 = vadd.f32 0.0, %v776
        %778 = vdwg.mxu0
        %v779 = vld [vmem:[%s2] sm:$0xff]
        %v780 = vld [vmem:[%s2 + $0x8] sm:$0xff]
        %v781 = vld [vmem:[%s2 + $0x10] sm:$0xff]
        %v782 = vld [vmem:[%s2 + $0x18] sm:$0xff]
        %v784 = vsel %vm486, %v708, 0
        %786 = vmatpush.msra.mxu0 0.0
        %787 = vmatpush.msra.mxu0 0.0
        %788 = vmatpush.msra.mxu0 0.0
        %789 = vmatpush.msra.mxu0 0.0
        %790 = vmatpush.msra.mxu0 0.0
        %791 = vmatpush.msra.mxu0 0.0
        %792 = vmatpush.msra.mxu0 0.0
        %793 = vmatpush.msra.mxu0 0.0
        %794 = vmatpush.msra.mxu0 0.0
        %795 = vmatpush.msra.mxu0 0.0
        %796 = vmatpush.msra.mxu0 0.0
        %797 = vmatpush.msra.mxu0 0.0
        %798 = vmatpush.msra.mxu0 0.0
        %799 = vmatpush.msra.mxu0 0.0
        %800 = vmatpush.msra.mxu0 0.0
        %801 = vmatpush.msra.mxu0 %v779
        %802 = vmatmul.f32.gmra.mxu0 %v784
        %v803 = vpop.f32.mrf.mxu0
        %v804 = vadd.f32 0.0, %v803
        %805 = vdwg.mxu0
        %v807 = vsel %vm486, %v731, 0
        %809 = vmatpush.msra.mxu0 0.0
        %810 = vmatpush.msra.mxu0 0.0
        %811 = vmatpush.msra.mxu0 0.0
        %812 = vmatpush.msra.mxu0 0.0
        %813 = vmatpush.msra.mxu0 0.0
        %814 = vmatpush.msra.mxu0 0.0
        %815 = vmatpush.msra.mxu0 0.0
        %816 = vmatpush.msra.mxu0 0.0
        %817 = vmatpush.msra.mxu0 0.0
        %818 = vmatpush.msra.mxu0 0.0
        %819 = vmatpush.msra.mxu0 0.0
        %820 = vmatpush.msra.mxu0 0.0
        %821 = vmatpush.msra.mxu0 0.0
        %822 = vmatpush.msra.mxu0 0.0
        %823 = vmatpush.msra.mxu0 0.0
        %824 = vmatpush.msra.mxu0 %v780
        %825 = vmatmul.f32.gmra.mxu0 %v807
        %v826 = vpop.f32.mrf.mxu0
        %v827 = vadd.f32 0.0, %v826
        %828 = vdwg.mxu0
        %v830 = vsel %vm486, %v754, 0
        %832 = vmatpush.msra.mxu0 0.0
        %833 = vmatpush.msra.mxu0 0.0
        %834 = vmatpush.msra.mxu0 0.0
        %835 = vmatpush.msra.mxu0 0.0
        %836 = vmatpush.msra.mxu0 0.0
        %837 = vmatpush.msra.mxu0 0.0
        %838 = vmatpush.msra.mxu0 0.0
        %839 = vmatpush.msra.mxu0 0.0
        %840 = vmatpush.msra.mxu0 0.0
        %841 = vmatpush.msra.mxu0 0.0
        %842 = vmatpush.msra.mxu0 0.0
        %843 = vmatpush.msra.mxu0 0.0
        %844 = vmatpush.msra.mxu0 0.0
        %845 = vmatpush.msra.mxu0 0.0
        %846 = vmatpush.msra.mxu0 0.0
        %847 = vmatpush.msra.mxu0 %v781
        %848 = vmatmul.f32.gmra.mxu0 %v830
        %v849 = vpop.f32.mrf.mxu0
        %v850 = vadd.f32 0.0, %v849
        %851 = vdwg.mxu0
        %v853 = vsel %vm486, %v777, 0
        %855 = vmatpush.msra.mxu0 0.0
        %856 = vmatpush.msra.mxu0 0.0
        %857 = vmatpush.msra.mxu0 0.0
        %858 = vmatpush.msra.mxu0 0.0
        %859 = vmatpush.msra.mxu0 0.0
        %860 = vmatpush.msra.mxu0 0.0
        %861 = vmatpush.msra.mxu0 0.0
        %862 = vmatpush.msra.mxu0 0.0
        %863 = vmatpush.msra.mxu0 0.0
        %864 = vmatpush.msra.mxu0 0.0
        %865 = vmatpush.msra.mxu0 0.0
        %866 = vmatpush.msra.mxu0 0.0
        %867 = vmatpush.msra.mxu0 0.0
        %868 = vmatpush.msra.mxu0 0.0
        %869 = vmatpush.msra.mxu0 0.0
        %870 = vmatpush.msra.mxu0 %v782
        %871 = vmatmul.f32.gmra.mxu0 %v853
        %v872 = vpop.f32.mrf.mxu0
        %v873 = vadd.f32 0.0, %v872
        %874 = vdwg.mxu0
        %v875 = vsel %vm242, %v804, 0.0
        %v876 = vsel %vm242, %v827, 0.0
        %v877 = vadd.f32 %v875, %v876
        %v878 = vsel %vm242, %v850, 0.0
        %v879 = vadd.f32 %v877, %v878
        %v880 = vsel %vm242, %v873, 0.0
        %v881 = vadd.f32 %v879, %v880
        %v882 = vld [vmem:[%s3] sm:$0x1]
        %v884 = vperm.slane %v882, 0
        %v886 = vadd.f32 %v881, %v884
        %887 = vst.msk [vmem:[%s188] sm:$0xff] %vm242, %v886
        %s888 = sand.u32 %s115, 1
        %s889 = scalar_lea.sflag [#allocation3], %s888
        %s890 = sand.u32 %s115, 1
        %s891 = smul.addr %s890, 8
        %s892 = scalar_lea.vmem [#allocation2], %s891
        // Predicated region
        $region37: #{tpu_custom_call.1} parent=35 // pred_check
          %p893 = pneg %p125
        $region38: #{tpu_custom_call.1} parent=35 // pred_check_branch
          %895 = sbr.rel (%p893) target = $region40
        $region39: #{tpu_custom_call.1} parent=35 // pred_region
          %897 = vsyncadd %s889, 0
          %s898 = smul.addr %s18, 8
          %s899 = scalar_lea.hbm %s4, %s898
          %s901 = sshll.u32 %s892, 4
          %s902 = int_to_ptr.vmem [resolvable:$true] %s901
          %s903 = sshll.u32 %s899, 4
          %s904 = int_to_ptr.hbm [resolvable:$true] %s903
          %906 = dma.vmem_to_hbm [thread:$0]  %s902, 128, %s904, %s889
        $region40: #{tpu_custom_call.1} parent=35 // pred_fallthru
          _
      $region36: #{tpu_custom_call.1} parent=5 // pred_fallthru
        _
      %p907 = scmp.le.s32.totalorder 2, %s13
      // Predicated region
      $region41: #{tpu_custom_call.1} parent=5 // pred_check
        %p908 = pneg %p907
      $region42: #{tpu_custom_call.1} parent=5 // pred_check_branch
        %910 = sbr.rel (%p908) target = $region44
      $region43: #{tpu_custom_call.1} parent=5 // pred_region
        %s911 = ssub.s32 %s13, 2
        // Predicated region
        $region45: #{tpu_custom_call.1} parent=43 // pred_check
          %p912 = pneg %p131
        $region46: #{tpu_custom_call.1} parent=43 // pred_check_branch
          %914 = sbr.rel (%p912) target = $region48
        $region47: #{tpu_custom_call.1} parent=43 // pred_region
          %s915 = sand.u32 %s116, 1
          %s916 = scalar_lea.sflag [#allocation3], %s915
          %s917 = sand.u32 %s116, 1
          %s918 = smul.addr %s917, 8
          %s919 = scalar_lea.vmem [#allocation2], %s918
          %921 = dma.done %s916, 128
        $region48: #{tpu_custom_call.1} parent=43 // pred_fallthru
          _
      $region44: #{tpu_custom_call.1} parent=5 // pred_fallthru
        _
    $region6: #{tpu_custom_call.1} parent=1 // loop_footer
      %s17 = sadd.s32 1, %s13
    $region7: #{tpu_custom_call.1} parent=1 // loop_footer_branch
      %12 = sbr.rel target = $region3
    $region8: #{tpu_custom_call.1} parent=1 // loop_exit
      _
    %922 = vsyncpa [#allocation3], 1
    %s923 = scalar_lea.sflag [#allocation3], 1
    %924 = vsyncpa %s923, 1

</llo_original>
